<compile_context>
chip_gen: v7x
topology: tpu7x:2x2x1
jax: 0.10.0
libtpu: 0.0.40
codegen_flags: <defaults>
</compile_context>

<pallas_src>
import jax
import jax.numpy as jnp
from jax.experimental import pallas as pl
from jax.experimental.pallas import tpu as pltpu


def se_kernel(x_ref, w1t_ref, w2t_ref, o_ref):
    # x_ref  : (b_tile, C, T)  native dtype
    # w1t_ref: (C, H)  = W1.T  (first Linear, no bias)
    # w2t_ref: (H, C)  = W2.T  (second Linear, no bias)
    x = x_ref[...]
    inv_t = 1.0 / x_ref.shape[-1]

    # AdaptiveAvgPool1d(1): mean over T, accumulated in f32 -> (b_tile, C)
    y = jnp.sum(x, axis=-1, dtype=jnp.float32) * inv_t

    # fc: Linear -> ReLU -> Linear -> Sigmoid (all in f32; FLOPs are negligible
    # vs the HBM streaming cost, so no MXU-shape tuning is attempted).
    h = jnp.dot(y, w1t_ref[...], preferred_element_type=jnp.float32)   # (b_tile, H)
    h = jnp.maximum(h, 0.0)
    s = jnp.dot(h, w2t_ref[...], preferred_element_type=jnp.float32)   # (b_tile, C)
    s = jax.nn.sigmoid(s)

    # scale: x * s, broadcast along T (lanes). Multiply in native dtype so no
    # second full-tile f32 copy is materialized for low-precision inputs.
    o_ref[...] = (x * s.astype(x.dtype)[:, :, None]).astype(o_ref.dtype)


def se_layer(x, w1, w2, *, vmem_budget_bytes=24 * 1024 * 1024):
    B, C, T = x.shape
    H, C_in = w1.shape
    assert C_in == C and w2.shape == (C, H)

    # Pre-transpose the weights once (outside the kernel) so the MXU operands
    # arrive in their natural K-major layout — no per-step XLU transpose.
    w1t = jnp.transpose(w1)   # (C, H)
    w2t = jnp.transpose(w2)   # (H, C)

    itemsize = jnp.dtype(x.dtype).itemsize
    bytes_per_sample = C * T * itemsize
    # Auto double-buffering: 2 buffers for the x block + 2 for the out block.
    max_b_for_vmem = max(1, vmem_budget_bytes // (4 * bytes_per_sample))
    # Keep >= 2 grid steps when B allows it so the "parallel" axis can be
    # sharded across v7x's 2 TensorCores (harmless on v5e / v6e).
    b_cap = min(max_b_for_vmem, B if B < 2 else max(1, B // 2))
    b_tile = 1
    for cand in range(min(B, b_cap), 0, -1):
        if B % cand == 0:
            b_tile = cand
            break
    grid = (B // b_tile,)

    # TODO(synk): for very large C*T where a single (b_tile, C, T) block cannot
    # fit VMEM, switch to the two-pass variant (pass 1: T-tiled mean + FC,
    # pass 2: T-tiled scale) instead of shrinking b_tile below 1.

    weight_bytes = 2 * C * H * jnp.dtype(w1.dtype).itemsize
    vmem_limit = int(min(
        48 * 1024 * 1024,
        max(16 * 1024 * 1024,
            4 * b_tile * bytes_per_sample + 4 * weight_bytes + (2 << 20)),
    ))

    return pl.pallas_call(
        se_kernel,
        out_shape=jax.ShapeDtypeStruct((B, C, T), x.dtype),
        grid_spec=pltpu.PrefetchScalarGridSpec(
            num_scalar_prefetch=0,
            grid=grid,
            in_specs=[
                pl.BlockSpec((b_tile, C, T), lambda i: (i, 0, 0)),
                pl.BlockSpec((C, H), lambda i: (0, 0)),
                pl.BlockSpec((H, C), lambda i: (0, 0)),
            ],
            out_specs=pl.BlockSpec((b_tile, C, T), lambda i: (i, 0, 0)),
        ),
        compiler_params=pltpu.CompilerParams(
            dimension_semantics=("parallel",),
            vmem_limit_bytes=vmem_limit,
        ),
    )(x, w1t, w2t)


def se_reference(x, w1, w2):
    y = jnp.mean(x.astype(jnp.float32), axis=-1)
    h = jnp.maximum(y @ w1.T, 0.0)
    s = jax.nn.sigmoid(h @ w2.T)
    return (x.astype(jnp.float32) * s[:, :, None]).astype(x.dtype)


if __name__ == "__main__":
    B, C, T = 2, 32, 16
    reduction = 16
    H = C // reduction  # 2

    key = jax.random.PRNGKey(0)
    kx, k1, k2 = jax.random.split(key, 3)

    x = jax.random.normal(kx, (B, C, T), dtype=jnp.float32)
    # Deterministic synthetic weights for Linear(C, H) and Linear(H, C), no bias.
    w1 = jax.random.normal(k1, (H, C), dtype=jnp.float32) * 0.1
    w2 = jax.random.normal(k2, (C, H), dtype=jnp.float32) * 0.1

    out = se_layer(x, w1, w2)
    jax.block_until_ready(out)

    ref = se_reference(x, w1, w2)
    assert jnp.allclose(out, ref, atol=1e-5, rtol=1e-5), "mismatch vs reference"

    print("KERNEL_OK")
</pallas_src>

<mosaic_0001>
module attributes {stable_mosaic.version = 11 : i64} {
  func.func @se_kernel(%arg0: i32, %arg1: memref<1x32x16xf32, #tpu.memory_space<vmem>>, %arg2: memref<32x2xf32, #tpu.memory_space<vmem>>, %arg3: memref<2x32xf32, #tpu.memory_space<vmem>>, %arg4: memref<1x32x16xf32, #tpu.memory_space<vmem>>) attributes {dimension_semantics = [#tpu.dimension_semantics<parallel>], iteration_bounds = array<i64: 2>, scalar_prefetch = 0 : i64, scratch_operands = 0 : i64, tpu.core_type = #tpu.core_type<tc>, window_params = [{transform_indices = @transform_0, window_bounds = array<i64: 1, 32, 16>}, {pipeline_mode = #tpu.pipeline_mode<synchronous>, transform_indices = @transform_1, window_bounds = array<i64: 32, 2>}, {pipeline_mode = #tpu.pipeline_mode<synchronous>, transform_indices = @transform_2, window_bounds = array<i64: 2, 32>}, {transform_indices = @transform_3, window_bounds = array<i64: 1, 32, 16>}]} {
    %c0 = arith.constant 0 : index
    %c0_0 = arith.constant 0 : index
    %c0_1 = arith.constant 0 : index
    %0 = vector.load %arg1[%c0, %c0_0, %c0_1] : memref<1x32x16xf32, #tpu.memory_space<vmem>>, vector<1x32x16xf32>
    %cst = arith.constant dense<0.000000e+00> : vector<1x32xf32>
    %1 = vector.multi_reduction <add>, %0, %cst [2] : vector<1x32x16xf32> to vector<1x32xf32>
    %cst_2 = arith.constant 6.250000e-02 : f32
    %2 = vector.broadcast %cst_2 : f32 to vector<1x32xf32>
    %3 = arith.mulf %1, %2 : vector<1x32xf32>
    %c0_3 = arith.constant 0 : index
    %c0_4 = arith.constant 0 : index
    %4 = vector.load %arg2[%c0_3, %c0_4] : memref<32x2xf32, #tpu.memory_space<vmem>>, vector<32x2xf32>
    %cst_5 = arith.constant dense<0.000000e+00> : vector<1x2xf32>
    %5 = tpu.matmul %3, %4, %cst_5 {dimension_numbers = #tpu.dot_dimension_numbers<[1], [0], [0], [1], [0, 0, 1, 1], [], []>} : vector<1x32xf32>, vector<32x2xf32>, vector<1x2xf32> -> vector<1x2xf32>
    %cst_6 = arith.constant 0.000000e+00 : f32
    %6 = vector.broadcast %cst_6 : f32 to vector<1x2xf32>
    %7 = arith.maximumf %5, %6 : vector<1x2xf32>
    %c0_7 = arith.constant 0 : index
    %c0_8 = arith.constant 0 : index
    %8 = vector.load %arg3[%c0_7, %c0_8] : memref<2x32xf32, #tpu.memory_space<vmem>>, vector<2x32xf32>
    %cst_9 = arith.constant dense<0.000000e+00> : vector<1x32xf32>
    %9 = tpu.matmul %7, %8, %cst_9 {dimension_numbers = #tpu.dot_dimension_numbers<[1], [0], [0], [1], [0, 0, 1, 1], [], []>} : vector<1x2xf32>, vector<2x32xf32>, vector<1x32xf32> -> vector<1x32xf32>
    %10 = arith.negf %9 : vector<1x32xf32>
    %11 = math.exp %10 : vector<1x32xf32>
    %cst_10 = arith.constant 1.000000e+00 : f32
    %12 = vector.broadcast %cst_10 : f32 to vector<1x32xf32>
    %13 = arith.addf %12, %11 : vector<1x32xf32>
    %14 = arith.divf %12, %13 : vector<1x32xf32>
    %15 = vector.shape_cast %14 : vector<1x32xf32> to vector<1x32x1xf32>
    %16 = vector.broadcast %15 : vector<1x32x1xf32> to vector<1x32x16xf32>
    %17 = arith.mulf %0, %16 : vector<1x32x16xf32>
    %c0_11 = arith.constant 0 : index
    %c0_12 = arith.constant 0 : index
    %c0_13 = arith.constant 0 : index
    %18 = vector.load %arg4[%c0_11, %c0_12, %c0_13] : memref<1x32x16xf32, #tpu.memory_space<vmem>>, vector<1x32x16xf32>
    tpu.vector_store %arg4[%c0_11, %c0_12, %c0_13], %17 {strides = array<i32>} : memref<1x32x16xf32, #tpu.memory_space<vmem>>, vector<1x32x16xf32>,
    return
  }
  func.func @transform_0(%arg0: i32) -> (i32, i32, i32) {
    %c0_i32 = arith.constant 0 : i32
    %c0_i32_0 = arith.constant 0 : i32
    %c0_i32_1 = arith.constant 0 : i32
    return %arg0, %c0_i32, %c0_i32_0 : i32, i32, i32
  }
  func.func @transform_1(%arg0: i32) -> (i32, i32) {
    %c0_i32 = arith.constant 0 : i32
    %c0_i32_0 = arith.constant 0 : i32
    %c0_i32_1 = arith.constant 0 : i32
    return %c0_i32, %c0_i32_0 : i32, i32
  }
  func.func @transform_2(%arg0: i32) -> (i32, i32) {
    %c0_i32 = arith.constant 0 : i32
    %c0_i32_0 = arith.constant 0 : i32
    %c0_i32_1 = arith.constant 0 : i32
    return %c0_i32, %c0_i32_0 : i32, i32
  }
  func.func @transform_3(%arg0: i32) -> (i32, i32, i32) {
    %c0_i32 = arith.constant 0 : i32
    %c0_i32_0 = arith.constant 0 : i32
    %c0_i32_1 = arith.constant 0 : i32
    return %arg0, %c0_i32, %c0_i32_0 : i32, i32, i32
  }
}

</mosaic_0001>

<llo_original>
// kernel: tpu_custom_call.1
$region0: #{tpu_custom_call.1}
  #allocation0 [shape = 'u32[]', space=smem, size = 0x4, offset = 0x4, fixed_abs, tag = 'smem constant byte address 0x4 - core index']
  #allocation1 [shape = 'u32[144,128]{1,0:T(1,128)}', space=vmem, size = 0x12000, scoped, tag = 'internal scratch']
  %s0 = inlined_call_operand.vmem [shape: f32[2,32,16], index: 0, kind: input, shape index: {}]
  %s1 = inlined_call_operand.vmem [shape: f32[32,2], index: 1, kind: input, shape index: {}]
  %s2 = inlined_call_operand.vmem [shape: f32[2,32], index: 2, kind: input, shape index: {}]
  %s3 = inlined_call_operand.vmem [shape: f32[2,32,16], index: 3, kind: output, shape index: {}]
  %s4 = sld [smem:[#allocation0]]
  $region45: #{tpu_custom_call.1} parent=0
    _
  %s6 = ssub.s32 1, %s4
  %s7 = scalar_select 0, %s6, %s4
  loop: start=0, step=1, limit=4
  $region2: #{tpu_custom_call.1} parent=0 // loop_pre_header
    _
  $region3: #{tpu_custom_call.1} parent=0 // loop_header
    %s9 = sphi 0, %s13
    %p10 = scmp.ge.s32.totalorder %s9, 4
    %s19 = sphi 0, %s21
    %s22 = sphi 0, %s19
    %s23 = sphi 0, %s22
    %s39 = sphi 0, %s23
    %s43 = sphi 0, %s43
    %s45 = sphi 0, %s43
    %s46 = sphi 0, %s45
    %s60 = sphi 0, %s46
    %s64 = sphi 0, %s64
    %s66 = sphi 0, %s64
    %s67 = sphi 0, %s66
    %s81 = sphi 0, %s67
    %s87 = sphi 0, %s89
    %s90 = sphi 0, %s87
    %s91 = sphi 0, %s90
    %s107 = sphi 0, %s91
  $region4: #{tpu_custom_call.1} parent=0 // loop_header_branch
    %12 = sbr.rel (%p10) target = $region8
  $region5: #{tpu_custom_call.1} parent=0 // loop_body
    %s14 = ssub.s32 %s9, 1
    %s15 = ssub.s32 %s9, 2
    %s16 = sadd.s32 %s9, 1
    %s17 = ssub.s32 %s9, %s16
    %p18 = scmp.eq.s32.totalorder %s17, 0
    %s20 = sadd.s32 %s19, 1
    %s21 = scalar_select %p18, %s19, %s20
    %p24 = pneg %p18
    %p25 = scmp.eq.s32.totalorder %s9, 1
    %p26 = por %p24, %p25
    %p27 = scmp.ne.s32.totalorder %s19, %s22
    %p28 = scmp.eq.s32.totalorder %s9, 0
    %p29 = por %p27, %p28
    %p30 = scmp.ne.s32.totalorder %s19, %s22
    %p31 = scmp.eq.s32.totalorder %s14, 1
    %p32 = por %p30, %p31
    %p33 = scmp.ne.s32.totalorder %s22, %s23
    %p34 = scmp.eq.s32.totalorder %s14, 0
    %p35 = por %p33, %p34
    %p36 = scmp.ne.s32.totalorder %s22, %s23
    %p37 = scmp.eq.s32.totalorder %s15, 1
    %p38 = por %p36, %p37
    %p40 = scmp.ne.s32.totalorder %s23, %s39
    %p41 = scmp.eq.s32.totalorder %s15, 0
    %p42 = por %p40, %p41
    %s44 = sadd.s32 %s43, 1
    %p47 = scmp.eq.s32.totalorder %s9, 1
    %p48 = scmp.ne.s32.totalorder %s43, %s45
    %p49 = scmp.eq.s32.totalorder %s9, 0
    %p50 = por %p48, %p49
    %p51 = scmp.ne.s32.totalorder %s43, %s45
    %p52 = scmp.eq.s32.totalorder %s14, 1
    %p53 = por %p51, %p52
    %p54 = scmp.ne.s32.totalorder %s45, %s46
    %p55 = scmp.eq.s32.totalorder %s14, 0
    %p56 = por %p54, %p55
    %p57 = scmp.ne.s32.totalorder %s45, %s46
    %p58 = scmp.eq.s32.totalorder %s15, 1
    %p59 = por %p57, %p58
    %p61 = scmp.ne.s32.totalorder %s46, %s60
    %p62 = scmp.eq.s32.totalorder %s15, 0
    %p63 = por %p61, %p62
    %s65 = sadd.s32 %s64, 1
    %p68 = scmp.eq.s32.totalorder %s9, 1
    %p69 = scmp.ne.s32.totalorder %s64, %s66
    %p70 = scmp.eq.s32.totalorder %s9, 0
    %p71 = por %p69, %p70
    %p72 = scmp.ne.s32.totalorder %s64, %s66
    %p73 = scmp.eq.s32.totalorder %s14, 1
    %p74 = por %p72, %p73
    %p75 = scmp.ne.s32.totalorder %s66, %s67
    %p76 = scmp.eq.s32.totalorder %s14, 0
    %p77 = por %p75, %p76
    %p78 = scmp.ne.s32.totalorder %s66, %s67
    %p79 = scmp.eq.s32.totalorder %s15, 1
    %p80 = por %p78, %p79
    %p82 = scmp.ne.s32.totalorder %s67, %s81
    %p83 = scmp.eq.s32.totalorder %s15, 0
    %p84 = por %p82, %p83
    %s85 = ssub.s32 %s9, %s16
    %p86 = scmp.eq.s32.totalorder %s85, 0
    %s88 = sadd.s32 %s87, 1
    %s89 = scalar_select %p86, %s87, %s88
    %p92 = pneg %p86
    %p93 = scmp.eq.s32.totalorder %s9, 1
    %p94 = por %p92, %p93
    %p95 = scmp.ne.s32.totalorder %s87, %s90
    %p96 = scmp.eq.s32.totalorder %s9, 0
    %p97 = por %p95, %p96
    %p98 = scmp.ne.s32.totalorder %s87, %s90
    %p99 = scmp.eq.s32.totalorder %s14, 1
    %p100 = por %p98, %p99
    %p101 = scmp.ne.s32.totalorder %s90, %s91
    %p102 = scmp.eq.s32.totalorder %s14, 0
    %p103 = por %p101, %p102
    %p104 = scmp.ne.s32.totalorder %s90, %s91
    %p105 = scmp.eq.s32.totalorder %s15, 1
    %p106 = por %p104, %p105
    %p108 = scmp.ne.s32.totalorder %s91, %s107
    %p109 = scmp.eq.s32.totalorder %s15, 0
    %p110 = por %p108, %p109
    %p111 = scmp.le.s32.totalorder 1, %s9
    %p112 = scmp.lt.s32.totalorder %s9, 3
    %p113 = pnand %p111, %p112
    %p114 = pneg %p113
    // Predicated region
    $region9: #{tpu_custom_call.1} parent=5 // pred_check
      _
    $region10: #{tpu_custom_call.1} parent=5 // pred_check_branch
      %116 = sbr.rel (%p113) target = $region12
    $region11: #{tpu_custom_call.1} parent=5 // pred_region
      %s117 = ssub.s32 %s9, 1
      // Predicated region
      $region13: #{tpu_custom_call.1} parent=11 // pred_check
        %p118 = pneg %p56
      $region14: #{tpu_custom_call.1} parent=11 // pred_check_branch
        %120 = sbr.rel (%p118) target = $region16
      $region15: #{tpu_custom_call.1} parent=11 // pred_region
        _
      $region16: #{tpu_custom_call.1} parent=11 // pred_fallthru
        _
      // Predicated region
      $region17: #{tpu_custom_call.1} parent=11 // pred_check
        %p121 = pneg %p77
      $region18: #{tpu_custom_call.1} parent=11 // pred_check_branch
        %123 = sbr.rel (%p121) target = $region20
      $region19: #{tpu_custom_call.1} parent=11 // pred_region
        _
      $region20: #{tpu_custom_call.1} parent=11 // pred_fallthru
        _
    $region12: #{tpu_custom_call.1} parent=5 // pred_fallthru
      _
    %p124 = scmp.lt.s32.totalorder %s9, 2
    // Predicated region
    $region21: #{tpu_custom_call.1} parent=5 // pred_check
      %p125 = pneg %p124
    $region22: #{tpu_custom_call.1} parent=5 // pred_check_branch
      %127 = sbr.rel (%p125) target = $region24
    $region23: #{tpu_custom_call.1} parent=5 // pred_region
      // Predicated region
      $region25: #{tpu_custom_call.1} parent=23 // pred_check
        %p128 = pneg %p29
      $region26: #{tpu_custom_call.1} parent=23 // pred_check_branch
        %130 = sbr.rel (%p128) target = $region28
      $region27: #{tpu_custom_call.1} parent=23 // pred_region
        %p131 = scmp.lt.s32.totalorder %s9, 1
        %s132 = scalar_select %p131, %s9, 1
        %s133 = smul.addr %s132, 4
        %s134 = smul.addr %s133, 8
        %s135 = scalar_lea.vmem %s0, %s134
      $region28: #{tpu_custom_call.1} parent=23 // pred_fallthru
        _
    $region24: #{tpu_custom_call.1} parent=5 // pred_fallthru
      _
    %p136 = scmp.le.s32.totalorder 1, %s9
    %p137 = scmp.lt.s32.totalorder %s9, 3
    %p138 = pnand %p136, %p137
    %p139 = pneg %p138
    // Predicated region
    $region29: #{tpu_custom_call.1} parent=5 // pred_check
      _
    $region30: #{tpu_custom_call.1} parent=5 // pred_check_branch
      %141 = sbr.rel (%p138) target = $region32
    $region31: #{tpu_custom_call.1} parent=5 // pred_region
      %s142 = ssub.s32 %s9, 1
      %p143 = scmp.lt.s32.totalorder %s14, 1
      %s144 = scalar_select %p143, %s14, 1
      %s145 = smul.addr %s144, 4
      %s146 = smul.addr %s145, 8
      %s147 = scalar_lea.vmem %s0, %s146
      %p148 = pneg %p35
      %p149 = pneg %p32
      %p150 = pneg %p56
      %p151 = pneg %p53
      %p152 = pneg %p77
      %p153 = pneg %p74
      %p154 = pneg %p103
      %p155 = pneg %p100
      %p156 = scmp.lt.s32.totalorder %s14, 1
      %s157 = scalar_select %p156, %s14, 1
      %s158 = smul.addr %s157, 4
      %s159 = smul.addr %s158, 8
      %s160 = scalar_lea.vmem %s3, %s159
      %p161 = scmp.lt.s32.totalorder %s14, 1
      %s162 = scalar_select %p161, %s14, 1
      %s163 = smul.addr %s162, 4
      %s164 = smul.addr %s163, 8
      %s165 = scalar_lea.vmem %s0, %s164
      %p166 = scmp.lt.s32.totalorder %s14, 1
      %s167 = scalar_select %p166, %s14, 1
      %s168 = smul.addr %s167, 4
      %s169 = smul.addr %s168, 8
      %s170 = scalar_lea.vmem %s3, %s169
      %v171 = vld [vmem:[%s165] sm:$0xff]
      %v172 = vld [vmem:[%s165 + $0x8] sm:$0xff]
      %v173 = vld [vmem:[%s165 + $0x10] sm:$0xff]
      %v174 = vld [vmem:[%s165 + $0x18] sm:$0xff]
      %vm175 = vcmask 130048
      %v176 = vsel %vm175, %v171, 0.0
      %177 = vadd.xlane.f32.xlu0 %v176
      %v178 = vpop.xlane.xlu0 %177
      %v179 = vsel %vm175, %v172, 0.0
      %180 = vadd.xlane.f32.xlu0 %v179
      %v181 = vpop.xlane.xlu0 %180
      %v182 = vsel %vm175, %v173, 0.0
      %183 = vadd.xlane.f32.xlu0 %v182
      %v184 = vpop.xlane.xlu0 %183
      %v185 = vsel %vm175, %v174, 0.0
      %186 = vadd.xlane.f32.xlu0 %v185
      %v187 = vpop.xlane.xlu0 %186
      %v188 = vmul.f32 %v178, 0.0625
      %v189 = vmul.f32 %v181, 0.0625
      %v190 = vmul.f32 %v184, 0.0625
      %v191 = vmul.f32 %v187, 0.0625
      %v192 = vld [vmem:[%s1] sm:$0xff]
      %v193 = vld [vmem:[%s1 + $0x8] sm:$0xff]
      %v194 = vld [vmem:[%s1 + $0x10] sm:$0xff]
      %v195 = vld [vmem:[%s1 + $0x18] sm:$0xff]
      %v200 = vlaneseq
      %v201 = vand.u32 %v200, 127
      %v202 = vlaneseq
      %v203 = vshrl.u32 %v202, 7
      %v204 = vsub.s32 %v201, %v203
      %v205 = vrot.slane %v188, %v204
      %v206 = vadd.s32 %v201, 4294967288
      %v207 = vlaneseq
      %v208 = vshrl.u32 %v207, 7
      %v209 = vsub.s32 %v206, %v208
      %v210 = vrot.slane %v189, %v209
      %vm211 = vcmask 130112
      %v212 = vsel %vm211, %v210, %v205
      %v213 = vadd.s32 %v201, 4294967280
      %v214 = vlaneseq
      %v215 = vshrl.u32 %v214, 7
      %v216 = vsub.s32 %v213, %v215
      %v217 = vrot.slane %v190, %v216
      %vm218 = vcmask 195712
      %v219 = vsel %vm218, %v217, %v212
      %v220 = vadd.s32 %v201, 4294967272
      %v221 = vlaneseq
      %v222 = vshrl.u32 %v221, 7
      %v223 = vsub.s32 %v220, %v222
      %v224 = vrot.slane %v191, %v223
      %vm225 = vcmask 261312
      %v226 = vsel %vm225, %v224, %v219
      %vm227 = vcmask 261120
      %v228 = vsel %vm227, %v226, 0
      %230 = vmatprep.subr.mxu0 0.0
      %231 = vmatpush1.msra.mxu0 %v192
      %232 = vmatprep.subr.mxu0 0.0
      %233 = vmatpush1.msra.mxu0 %v193
      %234 = vmatprep.subr.mxu0 0.0
      %235 = vmatpush1.msra.mxu0 %v194
      %236 = vmatprep.subr.mxu0 0.0
      %237 = vmatpush1.msra.mxu0 %v195
      %238 = vmatprep.subr.mxu0 0.0
      %239 = vmatpush1.msra.mxu0 0.0
      %240 = vmatprep.subr.mxu0 0.0
      %241 = vmatpush1.msra.mxu0 0.0
      %242 = vmatprep.subr.mxu0 0.0
      %243 = vmatpush1.msra.mxu0 0.0
      %244 = vmatprep.subr.mxu0 0.0
      %245 = vmatpush1.msra.mxu0 0.0
      %246 = vmatprep.subr.mxu0 0.0
      %247 = vmatpush1.msra.mxu0 0.0
      %248 = vmatprep.subr.mxu0 0.0
      %249 = vmatpush1.msra.mxu0 0.0
      %250 = vmatprep.subr.mxu0 0.0
      %251 = vmatpush1.msra.mxu0 0.0
      %252 = vmatprep.subr.mxu0 0.0
      %253 = vmatpush1.msra.mxu0 0.0
      %254 = vmatprep.subr.mxu0 0.0
      %255 = vmatpush1.msra.mxu0 0.0
      %256 = vmatprep.subr.mxu0 0.0
      %257 = vmatpush1.msra.mxu0 0.0
      %258 = vmatprep.subr.mxu0 0.0
      %259 = vmatpush1.msra.mxu0 0.0
      %260 = vmatprep.subr.mxu0 0.0
      %261 = vmatpush1.msra.mxu0 0.0
      %262 = vmatprep.subr.mxu0 0.0
      %263 = vmatpush1.msra.mxu0 0.0
      %264 = vmatprep.subr.mxu0 0.0
      %265 = vmatpush1.msra.mxu0 0.0
      %266 = vmatprep.subr.mxu0 0.0
      %267 = vmatpush1.msra.mxu0 0.0
      %268 = vmatprep.subr.mxu0 0.0
      %269 = vmatpush1.msra.mxu0 0.0
      %270 = vmatprep.subr.mxu0 0.0
      %271 = vmatpush1.msra.mxu0 0.0
      %272 = vmatprep.subr.mxu0 0.0
      %273 = vmatpush1.msra.mxu0 0.0
      %274 = vmatprep.subr.mxu0 0.0
      %275 = vmatpush1.msra.mxu0 0.0
      %276 = vmatprep.subr.mxu0 0.0
      %277 = vmatpush1.msra.mxu0 0.0
      %278 = vmatprep.subr.mxu0 0.0
      %279 = vmatpush1.msra.mxu0 0.0
      %280 = vmatprep.subr.mxu0 0.0
      %281 = vmatpush1.msra.mxu0 0.0
      %282 = vmatprep.subr.mxu0 0.0
      %283 = vmatpush1.msra.mxu0 0.0
      %284 = vmatprep.subr.mxu0 0.0
      %285 = vmatpush1.msra.mxu0 0.0
      %286 = vmatprep.subr.mxu0 0.0
      %287 = vmatpush1.msra.mxu0 0.0
      %288 = vmatprep.subr.mxu0 0.0
      %289 = vmatpush1.msra.mxu0 0.0
      %290 = vmatprep.subr.mxu0 0.0
      %291 = vmatpush1.msra.mxu0 0.0
      %292 = vmatprep.subr.mxu0 0.0
      %293 = vmatpush1.msra.mxu0 0.0
      %294 = vmatprep.mubr.f32.mxu0 0.0
      %295 = vmatmul.mubr.f32.gmra.mrb[0].mxu0 %v228
      %v296 = vpop.f32.mrb[0].mxu0
      %v297 = vadd.f32 0.0, %v296
      %v298 = vpop.f32.mrb[0].mxu0
      %299 = vdwg.mxu0
      %v300 = vmax.f32 %v297, 0.0
      %v301 = vld [vmem:[%s2] sm:$0x3]
      %vm302 = vcmask 15360
      %v304 = vsel %vm302, %v300, 0
      %vm306 = vcmask 1041408
      %v308 = vsel %vm306, %v301, 0
      %310 = vmatprep.subr.mxu0 0.0
      %311 = vmatpush1.msra.mxu0 %v308
      %312 = vmatprep.subr.mxu0 0.0
      %313 = vmatpush1.msra.mxu0 0.0
      %314 = vmatprep.subr.mxu0 0.0
      %315 = vmatpush1.msra.mxu0 0.0
      %316 = vmatprep.subr.mxu0 0.0
      %317 = vmatpush1.msra.mxu0 0.0
      %318 = vmatprep.subr.mxu0 0.0
      %319 = vmatpush1.msra.mxu0 0.0
      %320 = vmatprep.subr.mxu0 0.0
      %321 = vmatpush1.msra.mxu0 0.0
      %322 = vmatprep.subr.mxu0 0.0
      %323 = vmatpush1.msra.mxu0 0.0
      %324 = vmatprep.subr.mxu0 0.0
      %325 = vmatpush1.msra.mxu0 0.0
      %326 = vmatprep.subr.mxu0 0.0
      %327 = vmatpush1.msra.mxu0 0.0
      %328 = vmatprep.subr.mxu0 0.0
      %329 = vmatpush1.msra.mxu0 0.0
      %330 = vmatprep.subr.mxu0 0.0
      %331 = vmatpush1.msra.mxu0 0.0
      %332 = vmatprep.subr.mxu0 0.0
      %333 = vmatpush1.msra.mxu0 0.0
      %334 = vmatprep.subr.mxu0 0.0
      %335 = vmatpush1.msra.mxu0 0.0
      %336 = vmatprep.subr.mxu0 0.0
      %337 = vmatpush1.msra.mxu0 0.0
      %338 = vmatprep.subr.mxu0 0.0
      %339 = vmatpush1.msra.mxu0 0.0
      %340 = vmatprep.subr.mxu0 0.0
      %341 = vmatpush1.msra.mxu0 0.0
      %342 = vmatprep.subr.mxu0 0.0
      %343 = vmatpush1.msra.mxu0 0.0
      %344 = vmatprep.subr.mxu0 0.0
      %345 = vmatpush1.msra.mxu0 0.0
      %346 = vmatprep.subr.mxu0 0.0
      %347 = vmatpush1.msra.mxu0 0.0
      %348 = vmatprep.subr.mxu0 0.0
      %349 = vmatpush1.msra.mxu0 0.0
      %350 = vmatprep.subr.mxu0 0.0
      %351 = vmatpush1.msra.mxu0 0.0
      %352 = vmatprep.subr.mxu0 0.0
      %353 = vmatpush1.msra.mxu0 0.0
      %354 = vmatprep.subr.mxu0 0.0
      %355 = vmatpush1.msra.mxu0 0.0
      %356 = vmatprep.subr.mxu0 0.0
      %357 = vmatpush1.msra.mxu0 0.0
      %358 = vmatprep.subr.mxu0 0.0
      %359 = vmatpush1.msra.mxu0 0.0
      %360 = vmatprep.subr.mxu0 0.0
      %361 = vmatpush1.msra.mxu0 0.0
      %362 = vmatprep.subr.mxu0 0.0
      %363 = vmatpush1.msra.mxu0 0.0
      %364 = vmatprep.subr.mxu0 0.0
      %365 = vmatpush1.msra.mxu0 0.0
      %366 = vmatprep.subr.mxu0 0.0
      %367 = vmatpush1.msra.mxu0 0.0
      %368 = vmatprep.subr.mxu0 0.0
      %369 = vmatpush1.msra.mxu0 0.0
      %370 = vmatprep.subr.mxu0 0.0
      %371 = vmatpush1.msra.mxu0 0.0
      %372 = vmatprep.subr.mxu0 0.0
      %373 = vmatpush1.msra.mxu0 0.0
      %374 = vmatprep.mubr.f32.mxu0 0.0
      %375 = vmatmul.mubr.f32.gmra.mrb[0].mxu0 %v304
      %v376 = vpop.f32.mrb[0].mxu0
      %v377 = vadd.f32 0.0, %v376
      %v378 = vpop.f32.mrb[0].mxu0
      %379 = vdwg.mxu0
      %v380 = vxor.u32 %v377, 2147483648
      %v381 = vmul.f32 %v380, 1.442695
      %v382 = vpow.pop %v381
      %v383 = vadd.f32 %v382, 1.0
      %v384 = vrcp.pop %v383
      %v385 = vmul.f32 1.0, %v384
      %v386 = vlaneseq
      %v387 = vshrl.u32 %v386, 7
      %v388 = vsub.s32 0, %v387
      %v389 = vrot.slane %v385, %v388
      %391 = vbcast.lane.b32.xlu0 %v389, 256
      %v392 = vpop.permute.xlu0 %391
      %s394 = sor.u32 256, 8
      %395 = vbcast.lane.b32.xlu0 %v389, %s394
      %v396 = vpop.permute.xlu0 %395
      %s398 = sor.u32 256, 16
      %399 = vbcast.lane.b32.xlu0 %v389, %s398
      %v400 = vpop.permute.xlu0 %399
      %s402 = sor.u32 256, 24
      %403 = vbcast.lane.b32.xlu0 %v389, %s402
      %v404 = vpop.permute.xlu0 %403
      %v405 = vmul.f32 %v171, %v392
      %v406 = vmul.f32 %v172, %v396
      %v407 = vmul.f32 %v173, %v400
      %v408 = vmul.f32 %v174, %v404
      %409 = vst.msk [vmem:[%s170] sm:$0xff] %vm175, %v405
      %410 = vst.msk [vmem:[%s170 + $0x8] sm:$0xff] %vm175, %v406
      %411 = vst.msk [vmem:[%s170 + $0x10] sm:$0xff] %vm175, %v407
      %412 = vst.msk [vmem:[%s170 + $0x18] sm:$0xff] %vm175, %v408
      %p413 = scmp.lt.s32.totalorder %s14, 1
      %s414 = scalar_select %p413, %s14, 1
      %s415 = smul.addr %s414, 4
      %s416 = smul.addr %s415, 8
      %s417 = scalar_lea.vmem %s3, %s416
      // Predicated region
      $region33: #{tpu_custom_call.1} parent=31 // pred_check
        %p418 = pneg %p100
      $region34: #{tpu_custom_call.1} parent=31 // pred_check_branch
        %420 = sbr.rel (%p418) target = $region36
      $region35: #{tpu_custom_call.1} parent=31 // pred_region
        _
      $region36: #{tpu_custom_call.1} parent=31 // pred_fallthru
        _
    $region32: #{tpu_custom_call.1} parent=5 // pred_fallthru
      _
    %p421 = scmp.le.s32.totalorder 2, %s9
    // Predicated region
    $region37: #{tpu_custom_call.1} parent=5 // pred_check
      %p422 = pneg %p421
    $region38: #{tpu_custom_call.1} parent=5 // pred_check_branch
      %424 = sbr.rel (%p422) target = $region40
    $region39: #{tpu_custom_call.1} parent=5 // pred_region
      %s425 = ssub.s32 %s9, 2
      // Predicated region
      $region41: #{tpu_custom_call.1} parent=39 // pred_check
        %p426 = pneg %p106
      $region42: #{tpu_custom_call.1} parent=39 // pred_check_branch
        %428 = sbr.rel (%p426) target = $region44
      $region43: #{tpu_custom_call.1} parent=39 // pred_region
        %p429 = scmp.lt.s32.totalorder %s15, 1
        %s430 = scalar_select %p429, %s15, 1
        %s431 = smul.addr %s430, 4
        %s432 = smul.addr %s431, 8
        %s433 = scalar_lea.vmem %s3, %s432
      $region44: #{tpu_custom_call.1} parent=39 // pred_fallthru
        _
    $region40: #{tpu_custom_call.1} parent=5 // pred_fallthru
      _
  $region6: #{tpu_custom_call.1} parent=0 // loop_footer
    %s13 = sadd.s32 1, %s9
  $region7: #{tpu_custom_call.1} parent=0 // loop_footer_branch
    %8 = sbr.rel target = $region3
  $region8: #{tpu_custom_call.1} parent=0 // loop_exit
    _

</llo_original>
